<compile_context>
chip_gen: v7x
topology: tpu7x:2x2x1
jax: 0.10.0
libtpu: 0.0.40
codegen_flags: <defaults>
</compile_context>

<pallas_src>
import functools

import jax
import jax.numpy as jnp
from jax import lax
from jax.experimental import pallas as pl
from jax.experimental.pallas import tpu as pltpu


def _make_kernel(bias_x, bias_y, mm_dtype):
    """Kernel body, specialized on static bias flags / matmul operand dtype."""

    def compute(x_ref, y_ref, wmm_ref, wbx_ref, wby_ref, wcr_ref,
                o_ref, core_ref, colb_ref):
        # Block shapes:
        #   x_ref  : (1, TSx, n_in)       y_ref  : (1, TSy, n_in)
        #   wmm_ref: (1, n_in, n_in)      |W| core block
        #   wbx_ref: (1, 1, n_in)         |W| bias_x row (feature part)
        #   wby_ref: (1, 1, n_in)         |W| bias_y column (as a row)
        #   wcr_ref: (1, 1, 1)            |W| bias_x/bias_y corner scalar
        #   o_ref  : (1, 1, TSx, TSy)
        #   core_ref: (TSx, n_in) scratch (mm_dtype);  colb_ref: (TSx, 1) f32 scratch
        j = pl.program_id(3)  # innermost Sy-tile axis ("arbitrary")

        # Projection cache: recompute only when the Sy-tile axis restarts.
        @pl.when(j == 0)
        def _():
            x = x_ref[0]
            core = jnp.dot(x.astype(mm_dtype), wmm_ref[0].astype(mm_dtype),
                           preferred_element_type=jnp.float32)
            if bias_x:
                core = core + wbx_ref[0].astype(jnp.float32)
            core_ref[...] = core.astype(core_ref.dtype)
            if bias_y:
                # bias_y column as a VPU mul + reduce: keeps the MXU N dim at n_in
                # instead of a lane-padded n_in + 1.
                colb = jnp.sum(
                    x.astype(jnp.float32) * wby_ref[0].astype(jnp.float32),
                    axis=-1, keepdims=True)
                if bias_x:
                    colb = colb + wcr_ref[0].astype(jnp.float32)
                colb_ref[...] = colb

        # Dominant MXU matmul: (TSx, n_in) contracted with (TSy, n_in) on features,
        # f32 accumulation.
        # TODO(synk): on v5e, bundle-dump to confirm the NT contraction does not add
        # a per-step XLU transpose of the y tile; if it does, pre-transpose y once
        # in the wrapper to (B, n_in, Sy) and switch to a plain jnp.dot.
        s = lax.dot_general(
            core_ref[...], y_ref[0].astype(mm_dtype),
            dimension_numbers=(((1,), (1,)), ((), ())),
            preferred_element_type=jnp.float32)           # (TSx, TSy)
        if bias_y:
            s = s + colb_ref[...]                          # broadcast over Sy lanes
        o_ref[0, 0] = s.astype(o_ref.dtype)

    def kernel(*refs):
        it = iter(refs)
        x_ref = next(it)
        y_ref = next(it)
        wmm_ref = next(it)
        wbx_ref = next(it) if bias_x else None
        wby_ref = next(it) if bias_y else None
        wcr_ref = next(it) if (bias_x and bias_y) else None
        o_ref = next(it)
        core_ref = next(it)
        colb_ref = next(it) if bias_y else None
        compute(x_ref, y_ref, wmm_ref, wbx_ref, wby_ref, wcr_ref,
                o_ref, core_ref, colb_ref)

    return kernel


@functools.partial(
    jax.jit,
    static_argnames=("bias_x", "bias_y", "compute_dtype", "tile_sx", "tile_sy"),
)
def biaffine_convex(x, y, weight, *, bias_x=True, bias_y=True,
                    compute_dtype=jnp.bfloat16, tile_sx=512, tile_sy=1024):
    """Pallas implementation of Biaffine_convex.forward.

    x: (B, Sx, n_in), y: (B, Sy, n_in), weight: (n_out, n_in+bias_x, n_in+bias_y)
    returns: (B, Sx, Sy) if n_out == 1 else (B, n_out, Sx, Sy)
    """
    B, Sx, n_in = x.shape
    By, Sy, n_in_y = y.shape
    assert By == B and n_in_y == n_in, (x.shape, y.shape)
    n_out = weight.shape[0]
    dx = n_in + int(bias_x)
    dy = n_in + int(bias_y)
    assert weight.shape == (n_out, dx, dy), weight.shape

    out_dtype = jnp.result_type(x.dtype, y.dtype, weight.dtype)
    mm_dtype = compute_dtype if compute_dtype is not None else out_dtype

    # Convexity |W| applied once here (weight tiny vs. activations); the bias row,
    # bias column and corner are split off so both MXU dims stay at exactly n_in.
    w_abs = jnp.abs(weight)
    w_mm = w_abs[:, :n_in, :n_in]                              # (n_out, n_in, n_in)

    # Tiles: full dim if it already fits, otherwise an aligned tile.
    tsx = Sx if Sx <= tile_sx else tile_sx
    tsy = Sy if Sy <= tile_sy else tile_sy
    if Sx > tsx:
        assert tsx % 8 == 0, "tile_sx must be a multiple of 8 when Sx is tiled"
    if Sy > tsy:
        assert tsy % 128 == 0, "tile_sy must be a multiple of 128 when Sy is tiled"
    grid_i = pl.cdiv(Sx, tsx)
    grid_j = pl.cdiv(Sy, tsy)
    # Grid order (b, i, n, j): x DMA'd once per (b, i) (not per output class); j is
    # innermost so the cached projection is reused across all Sy tiles.
    grid = (B, grid_i, n_out, grid_j)

    in_specs = [
        pl.BlockSpec((1, tsx, n_in), lambda b, i, n, j: (b, i, 0)),
        pl.BlockSpec((1, tsy, n_in), lambda b, i, n, j: (b, j, 0)),
        pl.BlockSpec((1, n_in, n_in), lambda b, i, n, j: (n, 0, 0)),
    ]
    operands = [x, y, w_mm]
    if bias_x:
        w_bx = w_abs[:, n_in:n_in + 1, :n_in]                  # (n_out, 1, n_in)
        operands.append(w_bx)
        in_specs.append(pl.BlockSpec((1, 1, n_in), lambda b, i, n, j: (n, 0, 0)))
    if bias_y:
        w_by = jnp.swapaxes(w_abs[:, :n_in, n_in:n_in + 1], 1, 2)  # (n_out, 1, n_in)
        operands.append(w_by)
        in_specs.append(pl.BlockSpec((1, 1, n_in), lambda b, i, n, j: (n, 0, 0)))
    if bias_x and bias_y:
        w_cr = w_abs[:, n_in:n_in + 1, n_in:n_in + 1]          # (n_out, 1, 1)
        operands.append(w_cr)
        in_specs.append(pl.BlockSpec((1, 1, 1), lambda b, i, n, j: (n, 0, 0)))

    out_spec = pl.BlockSpec((1, 1, tsx, tsy), lambda b, i, n, j: (b, n, i, j))

    scratch_shapes = [pltpu.VMEM((tsx, n_in), mm_dtype)]
    if bias_y:
        scratch_shapes.append(pltpu.VMEM((tsx, 1), jnp.float32))

    # Advisory cost for XLA's scheduler around the custom call.
    itemsize = jnp.dtype(x.dtype).itemsize
    flops = 2 * B * n_out * Sx * n_in * (Sy + n_in)
    bytes_accessed = int(
        B * Sx * n_in * itemsize                               # x: once per (b, i)
        + B * grid_i * n_out * Sy * n_in * itemsize            # y: per (i, n) re-stream
        + B * grid_i * n_out * n_in * dy * 4                   # |W| blocks
        + B * n_out * Sx * Sy * jnp.dtype(out_dtype).itemsize  # output
    )
    cost = pl.CostEstimate(flops=flops, transcendentals=0,
                           bytes_accessed=bytes_accessed)

    kernel = _make_kernel(bias_x, bias_y, mm_dtype)

    out = pl.pallas_call(
        kernel,
        out_shape=jax.ShapeDtypeStruct((B, n_out, Sx, Sy), out_dtype),
        grid_spec=pltpu.PrefetchScalarGridSpec(
            num_scalar_prefetch=0,
            grid=grid,
            in_specs=in_specs,
            out_specs=out_spec,
            scratch_shapes=scratch_shapes,
        ),
        compiler_params=pltpu.CompilerParams(
            # Output tiles are disjoint on all axes; the projection cache is carried
            # across the innermost Sy-tile axis, so that axis must stay "arbitrary".
            dimension_semantics=("parallel", "parallel", "parallel", "arbitrary"),
            # Sized for the default double-buffered tiles on v7x's 64 MiB VMEM;
            # v5e/v6e (128 MiB) have extra headroom.
            vmem_limit_bytes=48 * 1024 * 1024,
        ),
        cost_estimate=cost,
    )(*operands)

    if n_out == 1:
        out = jnp.squeeze(out, axis=1)   # torch .squeeze(1) only drops a size-1 dim
    return out


def _reference(x, y, weight, *, bias_x=True, bias_y=True):
    if bias_x:
        x = jnp.concatenate([x, jnp.ones(x.shape[:-1] + (1,), x.dtype)], axis=-1)
    if bias_y:
        y = jnp.concatenate([y, jnp.ones(y.shape[:-1] + (1,), y.dtype)], axis=-1)
    s = jnp.einsum("bxi,oij,byj->boxy", x, jnp.abs(weight), y,
                   precision=lax.Precision.HIGHEST)
    if weight.shape[0] == 1:
        s = jnp.squeeze(s, axis=1)
    return s


if __name__ == "__main__":
    key = jax.random.PRNGKey(0)

    def run_case(name, batch, sx, sy, n_in, n_out, bias_x, bias_y, k, **kw):
        kx, ky, kwt = jax.random.split(k, 3)
        x = jax.random.normal(kx, (batch, sx, n_in), dtype=jnp.float32)
        y = jax.random.normal(ky, (batch, sy, n_in), dtype=jnp.float32)
        # Module's reset_parameters() zeros the weight; use deterministic random
        # values so the |W| nonlinearity and every bias term is exercised.
        w = jax.random.normal(
            kwt, (n_out, n_in + int(bias_x), n_in + int(bias_y)), dtype=jnp.float32)
        ref = _reference(x, y, w, bias_x=bias_x, bias_y=bias_y)
        scale = max(float(jnp.max(jnp.abs(ref))), 1.0)

        def check(tag, out, rel_tol):
            assert out.shape == ref.shape, (name, tag, out.shape, ref.shape)
            err = float(jnp.max(jnp.abs(out.astype(jnp.float32) - ref)))
            assert err <= rel_tol * scale, (name, tag, err, scale)

        # Default path: bf16 MXU operands with f32 accumulation.
        out_bf16 = jax.block_until_ready(
            biaffine_convex(x, y, w, bias_x=bias_x, bias_y=bias_y, **kw))
        check("bf16", out_bf16, 3e-2)
        # Strict f32 parity path.
        out_f32 = jax.block_until_ready(
            biaffine_convex(x, y, w, bias_x=bias_x, bias_y=bias_y,
                            compute_dtype=None, **kw))
        check("f32", out_f32, 1e-3)

    keys = jax.random.split(key, 5)
    # Small case matching the module's typical usage.
    run_case("small", 2, 8, 8, 32, 1, True, True, keys[0])
    # Multi-tile case: exercises Sx/Sy tile axes, the n_out axis, the cached
    # projection (recompute at j==0, reuse across j) and lane-dense output tiles.
    run_case("multi_tile", 1, 256, 384, 128, 2, True, True, keys[1],
             tile_sx=128, tile_sy=128)
    # No-bias, multi-output: 4-D output path + kernel signature without bias refs.
    run_case("nobias_nout2", 2, 8, 16, 32, 2, False, False, keys[2])
    # Single-bias variants (bias_x-only row fold, bias_y-only column fold).
    run_case("bias_x_only", 1, 16, 8, 32, 1, True, False, keys[3])
    run_case("bias_y_only", 1, 8, 16, 32, 1, False, True, keys[4])

    print("KERNEL_OK")
</pallas_src>

<mosaic_0001>
module attributes {stable_mosaic.version = 11 : i64} {
  func.func @kernel(%arg0: i32, %arg1: i32, %arg2: i32, %arg3: i32, %arg4: memref<1x8x32xf32, #tpu.memory_space<vmem>>, %arg5: memref<1x8x32xf32, #tpu.memory_space<vmem>>, %arg6: memref<1x32x32xf32, #tpu.memory_space<vmem>>, %arg7: memref<1x1x32xf32, #tpu.memory_space<vmem>>, %arg8: memref<1x1x32xf32, #tpu.memory_space<vmem>>, %arg9: memref<1x1x1xf32, #tpu.memory_space<vmem>>, %arg10: memref<1x1x8x8xf32, #tpu.memory_space<vmem>>, %arg11: memref<8x32xbf16, #tpu.memory_space<vmem>>, %arg12: memref<8x1xf32, #tpu.memory_space<vmem>>) attributes {dimension_semantics = [#tpu.dimension_semantics<parallel>, #tpu.dimension_semantics<parallel>, #tpu.dimension_semantics<parallel>, #tpu.dimension_semantics<arbitrary>], iteration_bounds = array<i64: 2, 1, 1, 1>, scalar_prefetch = 0 : i64, scratch_operands = 2 : i64, tpu.core_type = #tpu.core_type<tc>, window_params = [{transform_indices = @transform_0, window_bounds = array<i64: 1, 8, 32>}, {transform_indices = @transform_1, window_bounds = array<i64: 1, 8, 32>}, {transform_indices = @transform_2, window_bounds = array<i64: 1, 32, 32>}, {transform_indices = @transform_3, window_bounds = array<i64: 1, 1, 32>}, {transform_indices = @transform_4, window_bounds = array<i64: 1, 1, 32>}, {transform_indices = @transform_5, window_bounds = array<i64: 1, 1, 1>}, {transform_indices = @transform_6, window_bounds = array<i64: 1, 1, 8, 8>}]} {
    %c0_i32 = arith.constant 0 : i32
    %0 = arith.cmpi eq, %arg3, %c0_i32 : i32
    %1 = arith.extui %0 : i1 to i32
    %c0_i32_0 = arith.constant 0 : i32
    %2 = arith.cmpi ne, %1, %c0_i32_0 : i32
    scf.if %2 {
      %c0_11 = arith.constant 0 : index
      %c0_12 = arith.constant 0 : index
      %c0_13 = arith.constant 0 : index
      %14 = vector.load %arg4[%c0_11, %c0_12, %c0_13] : memref<1x8x32xf32, #tpu.memory_space<vmem>>, vector<1x8x32xf32>
      %15 = vector.shape_cast %14 : vector<1x8x32xf32> to vector<8x32xf32>
      %16 = arith.truncf %15 : vector<8x32xf32> to vector<8x32xbf16>
      %c0_14 = arith.constant 0 : index
      %c0_15 = arith.constant 0 : index
      %c0_16 = arith.constant 0 : index
      %17 = vector.load %arg6[%c0_14, %c0_15, %c0_16] : memref<1x32x32xf32, #tpu.memory_space<vmem>>, vector<1x32x32xf32>
      %18 = vector.shape_cast %17 : vector<1x32x32xf32> to vector<32x32xf32>
      %19 = arith.truncf %18 : vector<32x32xf32> to vector<32x32xbf16>
      %cst_17 = arith.constant dense<0.000000e+00> : vector<8x32xf32>
      %20 = tpu.matmul %16, %19, %cst_17 {dimension_numbers = #tpu.dot_dimension_numbers<[1], [0], [0], [1], [0, 0, 1, 1], [], []>} : vector<8x32xbf16>, vector<32x32xbf16>, vector<8x32xf32> -> vector<8x32xf32>
      %c0_18 = arith.constant 0 : index
      %c0_19 = arith.constant 0 : index
      %c0_20 = arith.constant 0 : index
      %21 = vector.load %arg7[%c0_18, %c0_19, %c0_20] : memref<1x1x32xf32, #tpu.memory_space<vmem>>, vector<1x1x32xf32>
      %22 = vector.shape_cast %21 : vector<1x1x32xf32> to vector<1x32xf32>
      %23 = vector.broadcast %22 : vector<1x32xf32> to vector<8x32xf32>
      %24 = arith.addf %20, %23 : vector<8x32xf32>
      %25 = arith.truncf %24 : vector<8x32xf32> to vector<8x32xbf16>
      %c0_21 = arith.constant 0 : index
      %c0_22 = arith.constant 0 : index
      %26 = vector.load %arg11[%c0_21, %c0_22] : memref<8x32xbf16, #tpu.memory_space<vmem>>, vector<8x32xbf16>
      tpu.vector_store %arg11[%c0_21, %c0_22], %25 {strides = array<i32>} : memref<8x32xbf16, #tpu.memory_space<vmem>>, vector<8x32xbf16>,
      %c0_23 = arith.constant 0 : index
      %c0_24 = arith.constant 0 : index
      %c0_25 = arith.constant 0 : index
      %27 = vector.load %arg8[%c0_23, %c0_24, %c0_25] : memref<1x1x32xf32, #tpu.memory_space<vmem>>, vector<1x1x32xf32>
      %28 = vector.shape_cast %27 : vector<1x1x32xf32> to vector<1x32xf32>
      %29 = vector.broadcast %28 : vector<1x32xf32> to vector<8x32xf32>
      %30 = arith.mulf %15, %29 : vector<8x32xf32>
      %cst_26 = arith.constant dense<0.000000e+00> : vector<8xf32>
      %31 = vector.multi_reduction <add>, %30, %cst_26 [1] : vector<8x32xf32> to vector<8xf32>
      %32 = vector.shape_cast %31 : vector<8xf32> to vector<8x1xf32>
      %c0_27 = arith.constant 0 : index
      %c0_28 = arith.constant 0 : index
      %c0_29 = arith.constant 0 : index
      %33 = vector.load %arg9[%c0_27, %c0_28, %c0_29] : memref<1x1x1xf32, #tpu.memory_space<vmem>>, vector<1x1x1xf32>
      %34 = vector.shape_cast %33 : vector<1x1x1xf32> to vector<1x1xf32>
      %35 = vector.broadcast %34 : vector<1x1xf32> to vector<8x1xf32>
      %36 = arith.addf %32, %35 : vector<8x1xf32>
      %c0_30 = arith.constant 0 : index
      %c0_31 = arith.constant 0 : index
      %37 = vector.load %arg12[%c0_30, %c0_31] : memref<8x1xf32, #tpu.memory_space<vmem>>, vector<8x1xf32>
      tpu.vector_store %arg12[%c0_30, %c0_31], %36 {strides = array<i32>} : memref<8x1xf32, #tpu.memory_space<vmem>>, vector<8x1xf32>,
    } else {
    }
    %c0 = arith.constant 0 : index
    %c0_1 = arith.constant 0 : index
    %3 = vector.load %arg11[%c0, %c0_1] : memref<8x32xbf16, #tpu.memory_space<vmem>>, vector<8x32xbf16>
    %c0_2 = arith.constant 0 : index
    %c0_3 = arith.constant 0 : index
    %c0_4 = arith.constant 0 : index
    %4 = vector.load %arg5[%c0_2, %c0_3, %c0_4] : memref<1x8x32xf32, #tpu.memory_space<vmem>>, vector<1x8x32xf32>
    %5 = vector.shape_cast %4 : vector<1x8x32xf32> to vector<8x32xf32>
    %6 = arith.truncf %5 : vector<8x32xf32> to vector<8x32xbf16>
    %cst = arith.constant dense<0.000000e+00> : vector<8x8xf32>
    %7 = tpu.matmul %3, %6, %cst {dimension_numbers = #tpu.dot_dimension_numbers<[1], [1], [0], [0], [0, 0, 1, 0], [], []>} : vector<8x32xbf16>, vector<8x32xbf16>, vector<8x8xf32> -> vector<8x8xf32>
    %c0_5 = arith.constant 0 : index
    %c0_6 = arith.constant 0 : index
    %8 = vector.load %arg12[%c0_5, %c0_6] : memref<8x1xf32, #tpu.memory_space<vmem>>, vector<8x1xf32>
    %9 = vector.broadcast %8 : vector<8x1xf32> to vector<8x8xf32>
    %10 = arith.addf %7, %9 : vector<8x8xf32>
    %c0_7 = arith.constant 0 : index
    %c0_8 = arith.constant 0 : index
    %c0_9 = arith.constant 0 : index
    %c0_10 = arith.constant 0 : index
    %11 = vector.load %arg10[%c0_7, %c0_8, %c0_9, %c0_10] : memref<1x1x8x8xf32, #tpu.memory_space<vmem>>, vector<1x1x8x8xf32>
    %12 = vector.shape_cast %11 : vector<1x1x8x8xf32> to vector<8x8xf32>
    %13 = vector.shape_cast %10 : vector<8x8xf32> to vector<1x1x8x8xf32>
    tpu.vector_store %arg10[%c0_7, %c0_8, %c0_9, %c0_10], %13 {strides = array<i32>} : memref<1x1x8x8xf32, #tpu.memory_space<vmem>>, vector<1x1x8x8xf32>,
    return
  }
  func.func @transform_0(%arg0: i32, %arg1: i32, %arg2: i32, %arg3: i32) -> (i32, i32, i32) {
    %c0_i32 = arith.constant 0 : i32
    %c0_i32_0 = arith.constant 0 : i32
    return %arg0, %arg1, %c0_i32 : i32, i32, i32
  }
  func.func @transform_1(%arg0: i32, %arg1: i32, %arg2: i32, %arg3: i32) -> (i32, i32, i32) {
    %c0_i32 = arith.constant 0 : i32
    %c0_i32_0 = arith.constant 0 : i32
    return %arg0, %arg3, %c0_i32 : i32, i32, i32
  }
  func.func @transform_2(%arg0: i32, %arg1: i32, %arg2: i32, %arg3: i32) -> (i32, i32, i32) {
    %c0_i32 = arith.constant 0 : i32
    %c0_i32_0 = arith.constant 0 : i32
    %c0_i32_1 = arith.constant 0 : i32
    return %arg2, %c0_i32, %c0_i32_0 : i32, i32, i32
  }
  func.func @transform_3(%arg0: i32, %arg1: i32, %arg2: i32, %arg3: i32) -> (i32, i32, i32) {
    %c0_i32 = arith.constant 0 : i32
    %c0_i32_0 = arith.constant 0 : i32
    %c0_i32_1 = arith.constant 0 : i32
    return %arg2, %c0_i32, %c0_i32_0 : i32, i32, i32
  }
  func.func @transform_4(%arg0: i32, %arg1: i32, %arg2: i32, %arg3: i32) -> (i32, i32, i32) {
    %c0_i32 = arith.constant 0 : i32
    %c0_i32_0 = arith.constant 0 : i32
    %c0_i32_1 = arith.constant 0 : i32
    return %arg2, %c0_i32, %c0_i32_0 : i32, i32, i32
  }
  func.func @transform_5(%arg0: i32, %arg1: i32, %arg2: i32, %arg3: i32) -> (i32, i32, i32) {
    %c0_i32 = arith.constant 0 : i32
    %c0_i32_0 = arith.constant 0 : i32
    %c0_i32_1 = arith.constant 0 : i32
    return %arg2, %c0_i32, %c0_i32_0 : i32, i32, i32
  }
  func.func @transform_6(%arg0: i32, %arg1: i32, %arg2: i32, %arg3: i32) -> (i32, i32, i32, i32) {
    %c0_i32 = arith.constant 0 : i32
    return %arg0, %arg2, %arg1, %arg3 : i32, i32, i32, i32
  }
}

</mosaic_0001>

<llo_original>
// kernel: biaffine_convex.1
$region0: #{biaffine_convex.1}
  #allocation0 [shape = 'u32[]', space=smem, size = 0x4, offset = 0x4, fixed_abs, tag = 'smem constant byte address 0x4 - core index']
  #allocation1 [shape = 'u32[144,128]{1,0:T(1,128)}', space=vmem, size = 0x12000, scoped, tag = 'internal scratch']
  #allocation2 [shape = 'bf16[8,32]{1,0:T(8,128)(2,1)}', space=vmem, size = 0x800, scoped, tag = 'scratch operand']
  #allocation3 [shape = 'f32[8,1]{1,0:T(8,128)}', space=vmem, size = 0x1000, scoped, tag = 'scratch operand']
  #allocation4 [shape = 'f32[1,1,1]{2,1,0:T(1,128)S(1)}', space=vmem, size = 0x200, scoped, tag = 'scoped memory for biaffine_convex.1']
  %s0 = inlined_call_operand.vmem [shape: f32[2,8,32], index: 0, kind: input, shape index: {}]
  %s1 = inlined_call_operand.vmem [shape: f32[2,8,32], index: 1, kind: input, shape index: {}]
  %s2 = inlined_call_operand.vmem [shape: f32[1,32,32], index: 2, kind: input, shape index: {}]
  %s3 = inlined_call_operand.vmem [shape: f32[1,1,32], index: 3, kind: input, shape index: {}]
  %s4 = inlined_call_operand.vmem [shape: f32[1,1,32], index: 4, kind: input, shape index: {}]
  %s5 = inlined_call_operand.<no memory space> [shape: f32[1,1,1], index: 5, kind: input, shape index: {}]
  %s6 = inlined_call_operand.hbm [shape: f32[2,1,8,8], index: 6, kind: output, shape index: {}]
  %s7 = sld [smem:[#allocation0]]
  $region61: #{biaffine_convex.1} parent=0
    _
  %s9 = ssub.s32 1, %s7
  %s10 = scalar_select 0, %s9, %s7
  %v11 = vstv %s5
  %12 = vst [vmem:[#allocation4] sm:$0x1] %v11
  $region1: #{biaffine_convex.1} parent=0
    #allocation5 [shape = 'u8[8192]{0}', space=vmem, size = 0x2000, scoped, tag = 'output window, operand 0']
    #allocation6 [shape = 's32[2]{0}', space=sflag, size = 0x8, scoped, tag = 'scoped memory for biaffine_convex.1']
    %13 = vsyncpa [#allocation6], 0
    %s14 = scalar_lea.sflag [#allocation6], 1
    %15 = vsyncpa %s14, 0
    loop: start=0, step=1, limit=4
    $region2: #{biaffine_convex.1} parent=1 // loop_pre_header
      _
    $region3: #{biaffine_convex.1} parent=1 // loop_header
      %s17 = sphi 0, %s21
      %p18 = scmp.ge.s32.totalorder %s17, 4
      %s24 = sphi 0, %s50
      %s25 = sphi 0, %s46
      %s26 = sphi 0, %s42
      %s27 = sphi 0, %s38
      %s28 = sphi 0, %s24
      %s29 = sphi 0, %s25
      %s30 = sphi 0, %s26
      %s31 = sphi 0, %s27
      %s32 = sphi 0, %s28
      %s33 = sphi 0, %s29
      %s34 = sphi 0, %s30
      %s35 = sphi 0, %s31
      %s55 = sphi 0, %s57
      %s58 = sphi 0, %s55
      %s59 = sphi 0, %s58
      %s75 = sphi 0, %s59
      %s83 = sphi 0, %s85
      %s86 = sphi 0, %s83
      %s87 = sphi 0, %s86
      %s103 = sphi 0, %s87
      %s109 = sphi 0, %s111
      %s112 = sphi 0, %s109
      %s113 = sphi 0, %s112
      %s129 = sphi 0, %s113
      %s135 = sphi 0, %s137
      %s138 = sphi 0, %s135
      %s139 = sphi 0, %s138
      %s155 = sphi 0, %s139
      %s161 = sphi 0, %s163
      %s164 = sphi 0, %s161
      %s165 = sphi 0, %s164
      %s181 = sphi 0, %s165
      %s187 = sphi 0, %s189
      %s190 = sphi 0, %s187
      %s191 = sphi 0, %s190
      %s207 = sphi 0, %s191
      %s219 = sphi 0, %s221
      %s222 = sphi 0, %s219
      %s223 = sphi 0, %s222
      %s239 = sphi 0, %s223
    $region4: #{biaffine_convex.1} parent=1 // loop_header_branch
      %20 = sbr.rel (%p18) target = $region8
    $region5: #{biaffine_convex.1} parent=1 // loop_body
      %s22 = ssub.s32 %s17, 1
      %s23 = ssub.s32 %s17, 2
      %s36 = sadd.s32 1, %s27
      %p37 = scmp.ge.s32.totalorder %s36, 1
      %s38 = scalar_select %p37, 0, %s36
      %s39 = sadd.s32 1, %s26
      %s40 = scalar_select %p37, %s39, %s26
      %p41 = scmp.ge.s32.totalorder %s40, 1
      %s42 = scalar_select %p41, 0, %s40
      %s43 = sadd.s32 1, %s25
      %s44 = scalar_select %p41, %s43, %s25
      %p45 = scmp.ge.s32.totalorder %s44, 1
      %s46 = scalar_select %p45, 0, %s44
      %s47 = sadd.s32 1, %s24
      %s48 = scalar_select %p45, %s47, %s24
      %p49 = scmp.ge.s32.totalorder %s48, 2
      %s50 = scalar_select %p49, 0, %s48
      %s51 = ssub.s32 %s24, %s50
      %s52 = ssub.s32 %s25, %s46
      %s53 = sor.u32 %s51, %s52
      %p54 = scmp.eq.s32.totalorder %s53, 0
      %s56 = sadd.s32 %s55, 1
      %s57 = scalar_select %p54, %s55, %s56
      %p60 = pneg %p54
      %p61 = scmp.eq.s32.totalorder %s17, 1
      %p62 = por %p60, %p61
      %p63 = scmp.ne.s32.totalorder %s55, %s58
      %p64 = scmp.eq.s32.totalorder %s17, 0
      %p65 = por %p63, %p64
      %p66 = scmp.ne.s32.totalorder %s55, %s58
      %p67 = scmp.eq.s32.totalorder %s22, 1
      %p68 = por %p66, %p67
      %p69 = scmp.ne.s32.totalorder %s58, %s59
      %p70 = scmp.eq.s32.totalorder %s22, 0
      %p71 = por %p69, %p70
      %p72 = scmp.ne.s32.totalorder %s58, %s59
      %p73 = scmp.eq.s32.totalorder %s23, 1
      %p74 = por %p72, %p73
      %p76 = scmp.ne.s32.totalorder %s59, %s75
      %p77 = scmp.eq.s32.totalorder %s23, 0
      %p78 = por %p76, %p77
      %s79 = ssub.s32 %s24, %s50
      %s80 = ssub.s32 %s27, %s38
      %s81 = sor.u32 %s79, %s80
      %p82 = scmp.eq.s32.totalorder %s81, 0
      %s84 = sadd.s32 %s83, 1
      %s85 = scalar_select %p82, %s83, %s84
      %p88 = pneg %p82
      %p89 = scmp.eq.s32.totalorder %s17, 1
      %p90 = por %p88, %p89
      %p91 = scmp.ne.s32.totalorder %s83, %s86
      %p92 = scmp.eq.s32.totalorder %s17, 0
      %p93 = por %p91, %p92
      %p94 = scmp.ne.s32.totalorder %s83, %s86
      %p95 = scmp.eq.s32.totalorder %s22, 1
      %p96 = por %p94, %p95
      %p97 = scmp.ne.s32.totalorder %s86, %s87
      %p98 = scmp.eq.s32.totalorder %s22, 0
      %p99 = por %p97, %p98
      %p100 = scmp.ne.s32.totalorder %s86, %s87
      %p101 = scmp.eq.s32.totalorder %s23, 1
      %p102 = por %p100, %p101
      %p104 = scmp.ne.s32.totalorder %s87, %s103
      %p105 = scmp.eq.s32.totalorder %s23, 0
      %p106 = por %p104, %p105
      %s107 = ssub.s32 %s26, %s42
      %p108 = scmp.eq.s32.totalorder %s107, 0
      %s110 = sadd.s32 %s109, 1
      %s111 = scalar_select %p108, %s109, %s110
      %p114 = pneg %p108
      %p115 = scmp.eq.s32.totalorder %s17, 1
      %p116 = por %p114, %p115
      %p117 = scmp.ne.s32.totalorder %s109, %s112
      %p118 = scmp.eq.s32.totalorder %s17, 0
      %p119 = por %p117, %p118
      %p120 = scmp.ne.s32.totalorder %s109, %s112
      %p121 = scmp.eq.s32.totalorder %s22, 1
      %p122 = por %p120, %p121
      %p123 = scmp.ne.s32.totalorder %s112, %s113
      %p124 = scmp.eq.s32.totalorder %s22, 0
      %p125 = por %p123, %p124
      %p126 = scmp.ne.s32.totalorder %s112, %s113
      %p127 = scmp.eq.s32.totalorder %s23, 1
      %p128 = por %p126, %p127
      %p130 = scmp.ne.s32.totalorder %s113, %s129
      %p131 = scmp.eq.s32.totalorder %s23, 0
      %p132 = por %p130, %p131
      %s133 = ssub.s32 %s26, %s42
      %p134 = scmp.eq.s32.totalorder %s133, 0
      %s136 = sadd.s32 %s135, 1
      %s137 = scalar_select %p134, %s135, %s136
      %p140 = pneg %p134
      %p141 = scmp.eq.s32.totalorder %s17, 1
      %p142 = por %p140, %p141
      %p143 = scmp.ne.s32.totalorder %s135, %s138
      %p144 = scmp.eq.s32.totalorder %s17, 0
      %p145 = por %p143, %p144
      %p146 = scmp.ne.s32.totalorder %s135, %s138
      %p147 = scmp.eq.s32.totalorder %s22, 1
      %p148 = por %p146, %p147
      %p149 = scmp.ne.s32.totalorder %s138, %s139
      %p150 = scmp.eq.s32.totalorder %s22, 0
      %p151 = por %p149, %p150
      %p152 = scmp.ne.s32.totalorder %s138, %s139
      %p153 = scmp.eq.s32.totalorder %s23, 1
      %p154 = por %p152, %p153
      %p156 = scmp.ne.s32.totalorder %s139, %s155
      %p157 = scmp.eq.s32.totalorder %s23, 0
      %p158 = por %p156, %p157
      %s159 = ssub.s32 %s26, %s42
      %p160 = scmp.eq.s32.totalorder %s159, 0
      %s162 = sadd.s32 %s161, 1
      %s163 = scalar_select %p160, %s161, %s162
      %p166 = pneg %p160
      %p167 = scmp.eq.s32.totalorder %s17, 1
      %p168 = por %p166, %p167
      %p169 = scmp.ne.s32.totalorder %s161, %s164
      %p170 = scmp.eq.s32.totalorder %s17, 0
      %p171 = por %p169, %p170
      %p172 = scmp.ne.s32.totalorder %s161, %s164
      %p173 = scmp.eq.s32.totalorder %s22, 1
      %p174 = por %p172, %p173
      %p175 = scmp.ne.s32.totalorder %s164, %s165
      %p176 = scmp.eq.s32.totalorder %s22, 0
      %p177 = por %p175, %p176
      %p178 = scmp.ne.s32.totalorder %s164, %s165
      %p179 = scmp.eq.s32.totalorder %s23, 1
      %p180 = por %p178, %p179
      %p182 = scmp.ne.s32.totalorder %s165, %s181
      %p183 = scmp.eq.s32.totalorder %s23, 0
      %p184 = por %p182, %p183
      %s185 = ssub.s32 %s26, %s42
      %p186 = scmp.eq.s32.totalorder %s185, 0
      %s188 = sadd.s32 %s187, 1
      %s189 = scalar_select %p186, %s187, %s188
      %p192 = pneg %p186
      %p193 = scmp.eq.s32.totalorder %s17, 1
      %p194 = por %p192, %p193
      %p195 = scmp.ne.s32.totalorder %s187, %s190
      %p196 = scmp.eq.s32.totalorder %s17, 0
      %p197 = por %p195, %p196
      %p198 = scmp.ne.s32.totalorder %s187, %s190
      %p199 = scmp.eq.s32.totalorder %s22, 1
      %p200 = por %p198, %p199
      %p201 = scmp.ne.s32.totalorder %s190, %s191
      %p202 = scmp.eq.s32.totalorder %s22, 0
      %p203 = por %p201, %p202
      %p204 = scmp.ne.s32.totalorder %s190, %s191
      %p205 = scmp.eq.s32.totalorder %s23, 1
      %p206 = por %p204, %p205
      %p208 = scmp.ne.s32.totalorder %s191, %s207
      %p209 = scmp.eq.s32.totalorder %s23, 0
      %p210 = por %p208, %p209
      %s211 = ssub.s32 %s24, %s50
      %s212 = ssub.s32 %s26, %s42
      %s213 = sor.u32 %s211, %s212
      %s214 = ssub.s32 %s25, %s46
      %s215 = sor.u32 %s213, %s214
      %s216 = ssub.s32 %s27, %s38
      %s217 = sor.u32 %s215, %s216
      %p218 = scmp.eq.s32.totalorder %s217, 0
      %s220 = sadd.s32 %s219, 1
      %s221 = scalar_select %p218, %s219, %s220
      %p224 = pneg %p218
      %p225 = scmp.eq.s32.totalorder %s17, 1
      %p226 = por %p224, %p225
      %p227 = scmp.ne.s32.totalorder %s219, %s222
      %p228 = scmp.eq.s32.totalorder %s17, 0
      %p229 = por %p227, %p228
      %p230 = scmp.ne.s32.totalorder %s219, %s222
      %p231 = scmp.eq.s32.totalorder %s22, 1
      %p232 = por %p230, %p231
      %p233 = scmp.ne.s32.totalorder %s222, %s223
      %p234 = scmp.eq.s32.totalorder %s22, 0
      %p235 = por %p233, %p234
      %p236 = scmp.ne.s32.totalorder %s222, %s223
      %p237 = scmp.eq.s32.totalorder %s23, 1
      %p238 = por %p236, %p237
      %p240 = scmp.ne.s32.totalorder %s223, %s239
      %p241 = scmp.eq.s32.totalorder %s23, 0
      %p242 = por %p240, %p241
      %p243 = scmp.le.s32.totalorder 1, %s17
      %p244 = scmp.lt.s32.totalorder %s17, 3
      %p245 = pnand %p243, %p244
      %p246 = pneg %p245
      // Predicated region
      $region9: #{biaffine_convex.1} parent=5 // pred_check
        _
      $region10: #{biaffine_convex.1} parent=5 // pred_check_branch
        %248 = sbr.rel (%p245) target = $region12
      $region11: #{biaffine_convex.1} parent=5 // pred_region
        %s249 = ssub.s32 %s17, 1
        // Predicated region
        $region13: #{biaffine_convex.1} parent=11 // pred_check
          %p250 = pneg %p125
        $region14: #{biaffine_convex.1} parent=11 // pred_check_branch
          %252 = sbr.rel (%p250) target = $region16
        $region15: #{biaffine_convex.1} parent=11 // pred_region
          %p253 = scmp.lt.s32.totalorder %s30, 0
          %s254 = scalar_select %p253, %s30, 0
          %s255 = smul.addr %s254, 4
          %s256 = smul.addr %s255, 8
          %s257 = scalar_lea.vmem %s2, %s256
        $region16: #{biaffine_convex.1} parent=11 // pred_fallthru
          _
        // Predicated region
        $region17: #{biaffine_convex.1} parent=11 // pred_check
          %p258 = pneg %p151
        $region18: #{biaffine_convex.1} parent=11 // pred_check_branch
          %260 = sbr.rel (%p258) target = $region20
        $region19: #{biaffine_convex.1} parent=11 // pred_region
          %p261 = scmp.lt.s32.totalorder %s30, 0
          %s262 = scalar_select %p261, %s30, 0
          %s263 = scalar_lea.vmem %s3, %s262
        $region20: #{biaffine_convex.1} parent=11 // pred_fallthru
          _
        // Predicated region
        $region21: #{biaffine_convex.1} parent=11 // pred_check
          %p264 = pneg %p177
        $region22: #{biaffine_convex.1} parent=11 // pred_check_branch
          %266 = sbr.rel (%p264) target = $region24
        $region23: #{biaffine_convex.1} parent=11 // pred_region
          %p267 = scmp.lt.s32.totalorder %s30, 0
          %s268 = scalar_select %p267, %s30, 0
          %s269 = scalar_lea.vmem %s4, %s268
        $region24: #{biaffine_convex.1} parent=11 // pred_fallthru
          _
        // Predicated region
        $region25: #{biaffine_convex.1} parent=11 // pred_check
          %p270 = pneg %p203
        $region26: #{biaffine_convex.1} parent=11 // pred_check_branch
          %272 = sbr.rel (%p270) target = $region28
        $region27: #{biaffine_convex.1} parent=11 // pred_region
          %p273 = scmp.lt.s32.totalorder %s30, 0
          %s274 = scalar_select %p273, %s30, 0
          %s275 = scalar_lea.vmem [#allocation4], %s274
        $region28: #{biaffine_convex.1} parent=11 // pred_fallthru
          _
      $region12: #{biaffine_convex.1} parent=5 // pred_fallthru
        _
      %p276 = scmp.lt.s32.totalorder %s17, 2
      // Predicated region
      $region29: #{biaffine_convex.1} parent=5 // pred_check
        %p277 = pneg %p276
      $region30: #{biaffine_convex.1} parent=5 // pred_check_branch
        %279 = sbr.rel (%p277) target = $region32
      $region31: #{biaffine_convex.1} parent=5 // pred_region
        // Predicated region
        $region33: #{biaffine_convex.1} parent=31 // pred_check
          %p280 = pneg %p65
        $region34: #{biaffine_convex.1} parent=31 // pred_check_branch
          %282 = sbr.rel (%p280) target = $region36
        $region35: #{biaffine_convex.1} parent=31 // pred_region
          %p283 = scmp.lt.s32.totalorder %s24, 1
          %s284 = scalar_select %p283, %s24, 1
          %p285 = scmp.lt.s32.totalorder %s25, 0
          %s286 = scalar_select %p285, %s25, 0
          %s287 = sadd.s32 %s286, %s284
          %s288 = smul.addr %s287, 8
          %s289 = scalar_lea.vmem %s0, %s288
        $region36: #{biaffine_convex.1} parent=31 // pred_fallthru
          _
        // Predicated region
        $region37: #{biaffine_convex.1} parent=31 // pred_check
          %p290 = pneg %p93
        $region38: #{biaffine_convex.1} parent=31 // pred_check_branch
          %292 = sbr.rel (%p290) target = $region40
        $region39: #{biaffine_convex.1} parent=31 // pred_region
          %p293 = scmp.lt.s32.totalorder %s24, 1
          %s294 = scalar_select %p293, %s24, 1
          %p295 = scmp.lt.s32.totalorder %s27, 0
          %s296 = scalar_select %p295, %s27, 0
          %s297 = sadd.s32 %s296, %s294
          %s298 = smul.addr %s297, 8
          %s299 = scalar_lea.vmem %s1, %s298
        $region40: #{biaffine_convex.1} parent=31 // pred_fallthru
          _
      $region32: #{biaffine_convex.1} parent=5 // pred_fallthru
        _
      %p300 = scmp.le.s32.totalorder 1, %s17
      %p301 = scmp.lt.s32.totalorder %s17, 3
      %p302 = pnand %p300, %p301
      %p303 = pneg %p302
      // Predicated region
      $region41: #{biaffine_convex.1} parent=5 // pred_check
        _
      $region42: #{biaffine_convex.1} parent=5 // pred_check_branch
        %305 = sbr.rel (%p302) target = $region44
      $region43: #{biaffine_convex.1} parent=5 // pred_region
        %s306 = ssub.s32 %s17, 1
        %p307 = scmp.lt.s32.totalorder %s28, 1
        %s308 = scalar_select %p307, %s28, 1
        %p309 = scmp.lt.s32.totalorder %s29, 0
        %s310 = scalar_select %p309, %s29, 0
        %s311 = sadd.s32 %s310, %s308
        %s312 = smul.addr %s311, 8
        %s313 = scalar_lea.vmem %s0, %s312
        %p314 = pneg %p71
        %p315 = pneg %p68
        %p316 = scmp.lt.s32.totalorder %s28, 1
        %s317 = scalar_select %p316, %s28, 1
        %p318 = scmp.lt.s32.totalorder %s31, 0
        %s319 = scalar_select %p318, %s31, 0
        %s320 = sadd.s32 %s319, %s317
        %s321 = smul.addr %s320, 8
        %s322 = scalar_lea.vmem %s1, %s321
        %p323 = pneg %p99
        %p324 = pneg %p96
        %p325 = scmp.lt.s32.totalorder %s30, 0
        %s326 = scalar_select %p325, %s30, 0
        %s327 = smul.addr %s326, 4
        %s328 = smul.addr %s327, 8
        %s329 = scalar_lea.vmem %s2, %s328
        %p330 = pneg %p125
        %p331 = pneg %p122
        %p332 = scmp.lt.s32.totalorder %s30, 0
        %s333 = scalar_select %p332, %s30, 0
        %s334 = scalar_lea.vmem %s3, %s333
        %p335 = pneg %p151
        %p336 = pneg %p148
        %p337 = scmp.lt.s32.totalorder %s30, 0
        %s338 = scalar_select %p337, %s30, 0
        %s339 = scalar_lea.vmem %s4, %s338
        %p340 = pneg %p177
        %p341 = pneg %p174
        %p342 = scmp.lt.s32.totalorder %s30, 0
        %s343 = scalar_select %p342, %s30, 0
        %s344 = scalar_lea.vmem [#allocation4], %s343
        %p345 = pneg %p203
        %p346 = pneg %p200
        %p347 = pneg %p235
        %p348 = pneg %p232
        %s349 = sand.u32 %s222, 1
        %s350 = scalar_lea.sflag [#allocation6], %s349
        %s351 = sand.u32 %s222, 1
        %s352 = smul.addr %s351, 8
        %s353 = scalar_lea.vmem [#allocation5], %s352
        %p354 = scmp.lt.s32.totalorder %s28, 1
        %s355 = scalar_select %p354, %s28, 1
        %p356 = scmp.lt.s32.totalorder %s29, 0
        %s357 = scalar_select %p356, %s29, 0
        %s358 = sadd.s32 %s357, %s355
        %s359 = smul.addr %s358, 8
        %s360 = scalar_lea.vmem %s0, %s359
        %p361 = scmp.lt.s32.totalorder %s28, 1
        %s362 = scalar_select %p361, %s28, 1
        %p363 = scmp.lt.s32.totalorder %s31, 0
        %s364 = scalar_select %p363, %s31, 0
        %s365 = sadd.s32 %s364, %s362
        %s366 = smul.addr %s365, 8
        %s367 = scalar_lea.vmem %s1, %s366
        %p368 = scmp.lt.s32.totalorder %s30, 0
        %s369 = scalar_select %p368, %s30, 0
        %s370 = smul.addr %s369, 4
        %s371 = smul.addr %s370, 8
        %s372 = scalar_lea.vmem %s2, %s371
        %p373 = scmp.lt.s32.totalorder %s30, 0
        %s374 = scalar_select %p373, %s30, 0
        %s375 = scalar_lea.vmem %s3, %s374
        %p376 = scmp.lt.s32.totalorder %s30, 0
        %s377 = scalar_select %p376, %s30, 0
        %s378 = scalar_lea.vmem %s4, %s377
        %p379 = scmp.lt.s32.totalorder %s30, 0
        %s380 = scalar_select %p379, %s30, 0
        %s381 = scalar_lea.vmem [#allocation4], %s380
        %p383 = scmp.eq.s32.totalorder %s31, 0
        // Predicated region
        $region45: #{biaffine_convex.1} parent=43 // pred_check
          %p384 = pneg %p383
        $region46: #{biaffine_convex.1} parent=43 // pred_check_branch
          %386 = sbr.rel (%p384) target = $region48
        $region47: #{biaffine_convex.1} parent=43 // pred_region
          %v387 = vld [vmem:[%s360] sm:$0xff]
          %v388 = vpack.c.bf16 %v387, %v387
          %v389 = vld [vmem:[%s372] sm:$0xff]
          %v390 = vld [vmem:[%s372 + $0x8] sm:$0xff]
          %v391 = vld [vmem:[%s372 + $0x10] sm:$0xff]
          %v392 = vld [vmem:[%s372 + $0x18] sm:$0xff]
          %v393 = vpack.c.bf16 %v390, %v389
          %v394 = vpack.c.bf16 %v392, %v391
          %v395 = vld [vmem:[%s375] sm:$0x1]
          %v397 = vlaneseq
          %v398 = vshrl.u32 %v397, 7
          %v399 = vsub.s32 0, %v398
          %v400 = vrot.slane %v395, %v399
          %vm402 = vcmask 261120
          %v404 = vsel %vm402, %v388, 0
          %406 = vmatprep.subr.bf16.mxu0 0
          %407 = vmatpush1.bf16.msra.mxu0 %v393
          %408 = vmatprep.subr.bf16.mxu0 0
          %409 = vmatpush1.bf16.msra.mxu0 %v394
          %410 = vmatprep.subr.bf16.mxu0 0
          %411 = vmatpush1.bf16.msra.mxu0 0
          %412 = vmatprep.subr.bf16.mxu0 0
          %413 = vmatpush1.bf16.msra.mxu0 0
          %414 = vmatprep.subr.bf16.mxu0 0
          %415 = vmatpush1.bf16.msra.mxu0 0
          %416 = vmatprep.subr.bf16.mxu0 0
          %417 = vmatpush1.bf16.msra.mxu0 0
          %418 = vmatprep.subr.bf16.mxu0 0
          %419 = vmatpush1.bf16.msra.mxu0 0
          %420 = vmatprep.subr.bf16.mxu0 0
          %421 = vmatpush1.bf16.msra.mxu0 0
          %422 = vmatprep.subr.bf16.mxu0 0
          %423 = vmatpush1.bf16.msra.mxu0 0
          %424 = vmatprep.subr.bf16.mxu0 0
          %425 = vmatpush1.bf16.msra.mxu0 0
          %426 = vmatprep.subr.bf16.mxu0 0
          %427 = vmatpush1.bf16.msra.mxu0 0
          %428 = vmatprep.subr.bf16.mxu0 0
          %429 = vmatpush1.bf16.msra.mxu0 0
          %430 = vmatprep.subr.bf16.mxu0 0
          %431 = vmatpush1.bf16.msra.mxu0 0
          %432 = vmatprep.subr.bf16.mxu0 0
          %433 = vmatpush1.bf16.msra.mxu0 0
          %434 = vmatprep.subr.bf16.mxu0 0
          %435 = vmatpush1.bf16.msra.mxu0 0
          %436 = vmatprep.subr.bf16.mxu0 0
          %437 = vmatpush1.bf16.msra.mxu0 0
          %438 = vmatprep.mubr.bf16.mxu0 0
          %439 = vmatmul.mubr.bf16.gmra.mrb[0].mxu0 %v404
          %v440 = vpop.f32.mrb[0].mxu0
          %v441 = vadd.f32 %v400, %v440
          %v442 = vpop.f32.mrb[0].mxu0
          %v443 = vpop.f32.mrb[0].mxu0
          %v444 = vpop.f32.mrb[0].mxu0
          %445 = vdwg.mxu0
          %v446 = vpack.c.bf16 %v441, %v441
          %vm447 = vcmask 257024
          %448 = vst.msk [vmem:[#allocation2] sm:$0xf] %vm447, %v446
          %v449 = vld [vmem:[%s378] sm:$0x1]
          %v451 = vlaneseq
          %v452 = vshrl.u32 %v451, 7
          %v453 = vsub.s32 0, %v452
          %v454 = vrot.slane %v449, %v453
          %v456 = vmul.f32 %v387, %v454
          %v457 = vsel %vm402, %v456, 0.0
          %458 = vadd.xlane.f32.xlu0 %v457
          %v459 = vpop.xlane.xlu0 %458
          %v460 = vld [vmem:[%s381] sm:$0x1]
          %v462 = vlaneseq
          %v463 = vshrl.u32 %v462, 7
          %v464 = vsub.s32 0, %v463
          %v465 = vrot.slane %v460, %v464
          %v467 = vadd.f32 %v459, %v465
          %vm468 = vcmask 7168
          %469 = vst.msk [vmem:[#allocation3] sm:$0xff] %vm468, %v467
        $region48: #{biaffine_convex.1} parent=43 // pred_fallthru
          _
        %v470 = vld [vmem:[#allocation2] sm:$0xf]
        %v471 = vld [vmem:[%s367] sm:$0xff]
        %v472 = vpack.c.bf16 %v471, %v471
        %v473 = vld [vmem:[#allocation3] sm:$0xff]
        %475 = vset.pattern.permute.xlu0 0
        %476 = vperm.xlu0 %475, %v473
        %v477 = vpop.permute.xlu0 %476
        %vm479 = vcmask 261120
        %v481 = vsel %vm479, %v470, 0
        %v484 = vsel %vm479, %v472, 0
        %486 = vmatprep.subr.bf16.mxu0 0
        %487 = vmatpush1.bf16.xpose.msra.mxu0 %v484
        %488 = vmatprep.subr.bf16.mxu0 0
        %489 = vmatpush1.bf16.xpose.msra.mxu0 0
        %490 = vmatprep.subr.bf16.mxu0 0
        %491 = vmatpush1.bf16.xpose.msra.mxu0 0
        %492 = vmatprep.subr.bf16.mxu0 0
        %493 = vmatpush1.bf16.xpose.msra.mxu0 0
        %494 = vmatprep.subr.bf16.mxu0 0
        %495 = vmatpush1.bf16.xpose.msra.mxu0 0
        %496 = vmatprep.subr.bf16.mxu0 0
        %497 = vmatpush1.bf16.xpose.msra.mxu0 0
        %498 = vmatprep.subr.bf16.mxu0 0
        %499 = vmatpush1.bf16.xpose.msra.mxu0 0
        %500 = vmatprep.subr.bf16.mxu0 0
        %501 = vmatpush1.bf16.xpose.msra.mxu0 0
        %502 = vmatprep.subr.bf16.mxu0 0
        %503 = vmatpush1.bf16.xpose.msra.mxu0 0
        %504 = vmatprep.subr.bf16.mxu0 0
        %505 = vmatpush1.bf16.xpose.msra.mxu0 0
        %506 = vmatprep.subr.bf16.mxu0 0
        %507 = vmatpush1.bf16.xpose.msra.mxu0 0
        %508 = vmatprep.subr.bf16.mxu0 0
        %509 = vmatpush1.bf16.xpose.msra.mxu0 0
        %510 = vmatprep.subr.bf16.mxu0 0
        %511 = vmatpush1.bf16.xpose.msra.mxu0 0
        %512 = vmatprep.subr.bf16.mxu0 0
        %513 = vmatpush1.bf16.xpose.msra.mxu0 0
        %514 = vmatprep.subr.bf16.mxu0 0
        %515 = vmatpush1.bf16.xpose.msra.mxu0 0
        %516 = vmatprep.subr.bf16.mxu0 0
        %517 = vmatpush1.bf16.xpose.msra.mxu0 0
        %518 = vmatprep.mubr.bf16.mxu0 0
        %519 = vmatmul.mubr.bf16.gmra.mrb[0].mxu0 %v481
        %v520 = vpop.f32.mrb[0].mxu0
        %v521 = vadd.f32 %v477, %v520
        %v522 = vpop.f32.mrb[0].mxu0
        %v523 = vpop.f32.mrb[0].mxu0
        %v524 = vpop.f32.mrb[0].mxu0
        %525 = vdwg.mxu0
        %vm526 = vcmask 64512
        %527 = vst.msk [vmem:[%s353] sm:$0xff] %vm526, %v521
        %s528 = sand.u32 %s222, 1
        %s529 = scalar_lea.sflag [#allocation6], %s528
        %s530 = sand.u32 %s222, 1
        %s531 = smul.addr %s530, 8
        %s532 = scalar_lea.vmem [#allocation5], %s531
        // Predicated region
        $region49: #{biaffine_convex.1} parent=43 // pred_check
          %p533 = pneg %p232
        $region50: #{biaffine_convex.1} parent=43 // pred_check_branch
          %535 = sbr.rel (%p533) target = $region52
        $region51: #{biaffine_convex.1} parent=43 // pred_region
          %s537 = ssub.s32 128, 128
          %538 = vsyncadd %s529, %s537
          %s539 = sadd.s32 %s31, %s29
          %s540 = sadd.s32 %s539, %s30
          %s541 = sadd.s32 %s540, %s28
          %s542 = smul.addr %s541, 128
          %s543 = scalar_lea.hbm %s6, %s542
          %s545 = sshll.u32 %s532, 4
          %s546 = int_to_ptr.vmem [resolvable:$true] %s545
          %548 = dma.vmem_to_hbm [thread:$0]  %s546, 128, %s543, %s529
        $region52: #{biaffine_convex.1} parent=43 // pred_fallthru
          _
      $region44: #{biaffine_convex.1} parent=5 // pred_fallthru
        _
      %p549 = scmp.le.s32.totalorder 2, %s17
      // Predicated region
      $region53: #{biaffine_convex.1} parent=5 // pred_check
        %p550 = pneg %p549
      $region54: #{biaffine_convex.1} parent=5 // pred_check_branch
        %552 = sbr.rel (%p550) target = $region56
      $region55: #{biaffine_convex.1} parent=5 // pred_region
        %s553 = ssub.s32 %s17, 2
        // Predicated region
        $region57: #{biaffine_convex.1} parent=55 // pred_check
          %p554 = pneg %p238
        $region58: #{biaffine_convex.1} parent=55 // pred_check_branch
          %556 = sbr.rel (%p554) target = $region60
        $region59: #{biaffine_convex.1} parent=55 // pred_region
          %s557 = sand.u32 %s223, 1
          %s558 = scalar_lea.sflag [#allocation6], %s557
          %s559 = sand.u32 %s223, 1
          %s560 = smul.addr %s559, 8
          %s561 = scalar_lea.vmem [#allocation5], %s560
          %562 = dma.done %s558, 128
        $region60: #{biaffine_convex.1} parent=55 // pred_fallthru
          _
      $region56: #{biaffine_convex.1} parent=5 // pred_fallthru
        _
    $region6: #{biaffine_convex.1} parent=1 // loop_footer
      %s21 = sadd.s32 1, %s17
    $region7: #{biaffine_convex.1} parent=1 // loop_footer_branch
      %16 = sbr.rel target = $region3
    $region8: #{biaffine_convex.1} parent=1 // loop_exit
      _
    %563 = vsyncpa [#allocation6], 1
    %s564 = scalar_lea.sflag [#allocation6], 1
    %565 = vsyncpa %s564, 1

</llo_original>
